<compile_context>
chip_gen: v6e
topology: v6e:2x2x1
jax: 0.10.0
libtpu: 0.0.40
codegen_flags: <defaults>
</compile_context>

<pallas_src>
import functools

import jax
import jax.numpy as jnp
from jax.experimental import pallas as pl
from jax.experimental.pallas import tpu as pltpu


def mlp_kernel(x_ref, w1_ref, b1_ref, w2_ref, b2_ref, w3_ref, b3_ref, o_ref):
    # Feature-major activations: shapes are (features, tn) with tn on lanes.
    x = x_ref[...]                                               # (1, tn)

    # Layer 1 (1 -> 32): K=1 contraction == outer product -> VPU broadcast.
    h1 = jnp.maximum(w1_ref[...] * x + b1_ref[...], 0.0)         # (32, tn)

    # Layer 2 (32 -> 64): the only real matmul; run it on the MXU.
    h2 = jnp.dot(w2_ref[...], h1, preferred_element_type=jnp.float32)
    h2 = jnp.maximum(h2 + b2_ref[...], 0.0)                      # (64, tn)

    # Layer 3 (64 -> 1): N=1 output -> VPU multiply + sublane (XLU) reduce.
    out = jnp.sum(w3_ref[...] * h2, axis=0, keepdims=True)       # (1, tn)
    out = out + b3_ref[0, 0]                                     # scalar bias (SMEM)
    o_ref[...] = out.astype(o_ref.dtype)


@functools.partial(jax.jit, static_argnames=("tn",))
def model3_forward(x, w1, b1, w2, b2, w3, b3, *, tn=512):
    """x: (N, 1) float32 (PyTorch x.reshape(-1, 1)).
    Params in PyTorch nn.Linear convention:
      w1 (32, 1), b1 (32,), w2 (64, 32), b2 (64,), w3 (1, 64), b3 (1,)."""
    N = x.shape[0]
    n_tiles = pl.cdiv(N, tn)
    n_pad = n_tiles * tn

    # Transposed problem: batch on the lane axis, features on sublanes.
    x_t = jnp.pad(x[:, 0], (0, n_pad - N)).reshape(1, n_pad)     # (1, n_pad)
    b1_c = b1.reshape(32, 1)
    b2_c = b2.reshape(64, 1)
    w3_c = w3.reshape(64, 1)                                      # (1, 64) -> column
    b3_s = b3.reshape(1, 1)

    full = lambda shape: pl.BlockSpec(shape, lambda i: (0, 0))

    flops = 2 * n_pad * (32 + 32 * 64 + 64)
    bytes_accessed = 4 * (2 * n_pad + 32 + 32 + 64 * 32 + 64 + 64 + 1)

    out_t = pl.pallas_call(
        mlp_kernel,
        out_shape=jax.ShapeDtypeStruct((1, n_pad), jnp.float32),
        grid_spec=pltpu.PrefetchScalarGridSpec(
            num_scalar_prefetch=0,
            grid=(n_tiles,),
            in_specs=[
                pl.BlockSpec((1, tn), lambda i: (0, i)),          # x tile, lanes=batch
                full((32, 1)),                                    # w1 column
                full((32, 1)),                                    # b1 column
                full((64, 32)),                                   # w2
                full((64, 1)),                                    # b2 column
                full((64, 1)),                                    # w3 column
                pl.BlockSpec(memory_space=pltpu.MemorySpace.SMEM),  # b3 scalar
            ],
            out_specs=pl.BlockSpec((1, tn), lambda i: (0, i)),
        ),
        compiler_params=pltpu.CompilerParams(
            dimension_semantics=("parallel",),
        ),
        cost_estimate=pl.CostEstimate(
            flops=flops, transcendentals=0, bytes_accessed=bytes_accessed),
    )(x_t, w1, b1_c, w2, b2_c, w3_c, b3_s)

    return out_t[0, :N].reshape(N, 1)


def init_params(key):
    # PyTorch nn.Linear init: weight (out, in), bias (out,),
    # both U(-1/sqrt(fan_in), 1/sqrt(fan_in)).
    ks = jax.random.split(key, 6)

    def lin(kw, kb, fan_in, fan_out):
        bound = 1.0 / (fan_in ** 0.5)
        w = jax.random.uniform(kw, (fan_out, fan_in), jnp.float32, -bound, bound)
        b = jax.random.uniform(kb, (fan_out,), jnp.float32, -bound, bound)
        return w, b

    w1, b1 = lin(ks[0], ks[1], 1, 32)
    w2, b2 = lin(ks[2], ks[3], 32, 64)
    w3, b3 = lin(ks[4], ks[5], 64, 1)
    return w1, b1, w2, b2, w3, b3


def reference_forward(x, w1, b1, w2, b2, w3, b3):
    h1 = jnp.maximum(x @ w1.T + b1, 0.0)
    h2 = jnp.maximum(h1 @ w2.T + b2, 0.0)
    return h2 @ w3.T + b3


if __name__ == "__main__":
    key = jax.random.PRNGKey(0)
    kx, kp = jax.random.split(key)

    # Batch deliberately not a multiple of tn to exercise the padded-tile path.
    N = 1000
    x = jax.random.normal(kx, (N, 1), dtype=jnp.float32)
    params = init_params(kp)

    out = model3_forward(x, *params, tn=512)
    out = jax.block_until_ready(out)

    ref = reference_forward(x, *params)
    assert out.shape == (N, 1)
    assert jnp.allclose(out, ref, atol=1e-4, rtol=1e-4), "mismatch vs JAX reference"

    print("KERNEL_OK")
</pallas_src>

<mosaic_0001>
module attributes {stable_mosaic.version = 11 : i64} {
  func.func @mlp_kernel(%arg0: i32, %arg1: memref<1x512xf32, #tpu.memory_space<vmem>>, %arg2: memref<32x1xf32, #tpu.memory_space<vmem>>, %arg3: memref<32x1xf32, #tpu.memory_space<vmem>>, %arg4: memref<64x32xf32, #tpu.memory_space<vmem>>, %arg5: memref<64x1xf32, #tpu.memory_space<vmem>>, %arg6: memref<64x1xf32, #tpu.memory_space<vmem>>, %arg7: memref<1x1xf32, #tpu.memory_space<smem>>, %arg8: memref<1x512xf32, #tpu.memory_space<vmem>>) attributes {dimension_semantics = [#tpu.dimension_semantics<parallel>], iteration_bounds = array<i64: 2>, scalar_prefetch = 0 : i64, scratch_operands = 0 : i64, tpu.core_type = #tpu.core_type<tc>, window_params = [{transform_indices = @transform_0, window_bounds = array<i64: 1, 512>}, {pipeline_mode = #tpu.pipeline_mode<synchronous>, transform_indices = @transform_1, window_bounds = array<i64: 32, 1>}, {pipeline_mode = #tpu.pipeline_mode<synchronous>, transform_indices = @transform_2, window_bounds = array<i64: 32, 1>}, {pipeline_mode = #tpu.pipeline_mode<synchronous>, transform_indices = @transform_3, window_bounds = array<i64: 64, 32>}, {pipeline_mode = #tpu.pipeline_mode<synchronous>, transform_indices = @transform_4, window_bounds = array<i64: 64, 1>}, {pipeline_mode = #tpu.pipeline_mode<synchronous>, transform_indices = @transform_5, window_bounds = array<i64: 64, 1>}, {transform_indices = @transform_6, window_bounds = array<i64: 1, 1>}, {transform_indices = @transform_7, window_bounds = array<i64: 1, 512>}]} {
    %c0 = arith.constant 0 : index
    %c0_0 = arith.constant 0 : index
    %0 = vector.load %arg1[%c0, %c0_0] : memref<1x512xf32, #tpu.memory_space<vmem>>, vector<1x512xf32>
    %c0_1 = arith.constant 0 : index
    %c0_2 = arith.constant 0 : index
    %1 = vector.load %arg2[%c0_1, %c0_2] : memref<32x1xf32, #tpu.memory_space<vmem>>, vector<32x1xf32>
    %2 = vector.broadcast %1 : vector<32x1xf32> to vector<32x512xf32>
    %3 = vector.broadcast %0 : vector<1x512xf32> to vector<32x512xf32>
    %4 = arith.mulf %2, %3 : vector<32x512xf32>
    %c0_3 = arith.constant 0 : index
    %c0_4 = arith.constant 0 : index
    %5 = vector.load %arg3[%c0_3, %c0_4] : memref<32x1xf32, #tpu.memory_space<vmem>>, vector<32x1xf32>
    %6 = vector.broadcast %5 : vector<32x1xf32> to vector<32x512xf32>
    %7 = arith.addf %4, %6 : vector<32x512xf32>
    %cst = arith.constant 0.000000e+00 : f32
    %8 = vector.broadcast %cst : f32 to vector<32x512xf32>
    %9 = arith.maximumf %7, %8 : vector<32x512xf32>
    %c0_5 = arith.constant 0 : index
    %c0_6 = arith.constant 0 : index
    %10 = vector.load %arg4[%c0_5, %c0_6] : memref<64x32xf32, #tpu.memory_space<vmem>>, vector<64x32xf32>
    %cst_7 = arith.constant dense<0.000000e+00> : vector<64x512xf32>
    %11 = tpu.matmul %10, %9, %cst_7 {dimension_numbers = #tpu.dot_dimension_numbers<[1], [0], [0], [1], [0, 0, 1, 1], [], []>} : vector<64x32xf32>, vector<32x512xf32>, vector<64x512xf32> -> vector<64x512xf32>
    %c0_8 = arith.constant 0 : index
    %c0_9 = arith.constant 0 : index
    %12 = vector.load %arg5[%c0_8, %c0_9] : memref<64x1xf32, #tpu.memory_space<vmem>>, vector<64x1xf32>
    %13 = vector.broadcast %12 : vector<64x1xf32> to vector<64x512xf32>
    %14 = arith.addf %11, %13 : vector<64x512xf32>
    %cst_10 = arith.constant 0.000000e+00 : f32
    %15 = vector.broadcast %cst_10 : f32 to vector<64x512xf32>
    %16 = arith.maximumf %14, %15 : vector<64x512xf32>
    %c0_11 = arith.constant 0 : index
    %c0_12 = arith.constant 0 : index
    %17 = vector.load %arg6[%c0_11, %c0_12] : memref<64x1xf32, #tpu.memory_space<vmem>>, vector<64x1xf32>
    %18 = vector.broadcast %17 : vector<64x1xf32> to vector<64x512xf32>
    %19 = arith.mulf %18, %16 : vector<64x512xf32>
    %cst_13 = arith.constant dense<0.000000e+00> : vector<512xf32>
    %20 = vector.multi_reduction <add>, %19, %cst_13 [0] : vector<64x512xf32> to vector<512xf32>
    %21 = vector.shape_cast %20 : vector<512xf32> to vector<1x512xf32>
    %c0_14 = arith.constant 0 : index
    %c0_15 = arith.constant 0 : index
    %22 = memref.load %arg7[%c0_14, %c0_15] : memref<1x1xf32, #tpu.memory_space<smem>>
    %23 = vector.broadcast %22 : f32 to vector<1x512xf32>
    %24 = arith.addf %21, %23 : vector<1x512xf32>
    %c0_16 = arith.constant 0 : index
    %c0_17 = arith.constant 0 : index
    %25 = vector.load %arg8[%c0_16, %c0_17] : memref<1x512xf32, #tpu.memory_space<vmem>>, vector<1x512xf32>
    tpu.vector_store %arg8[%c0_16, %c0_17], %24 {strides = array<i32>} : memref<1x512xf32, #tpu.memory_space<vmem>>, vector<1x512xf32>,
    return
  }
  func.func @transform_0(%arg0: i32) -> (i32, i32) {
    %c0_i32 = arith.constant 0 : i32
    %c0_i32_0 = arith.constant 0 : i32
    return %c0_i32, %arg0 : i32, i32
  }
  func.func @transform_1(%arg0: i32) -> (i32, i32) {
    %c0_i32 = arith.constant 0 : i32
    %c0_i32_0 = arith.constant 0 : i32
    %c0_i32_1 = arith.constant 0 : i32
    return %c0_i32, %c0_i32_0 : i32, i32
  }
  func.func @transform_2(%arg0: i32) -> (i32, i32) {
    %c0_i32 = arith.constant 0 : i32
    %c0_i32_0 = arith.constant 0 : i32
    %c0_i32_1 = arith.constant 0 : i32
    return %c0_i32, %c0_i32_0 : i32, i32
  }
  func.func @transform_3(%arg0: i32) -> (i32, i32) {
    %c0_i32 = arith.constant 0 : i32
    %c0_i32_0 = arith.constant 0 : i32
    %c0_i32_1 = arith.constant 0 : i32
    return %c0_i32, %c0_i32_0 : i32, i32
  }
  func.func @transform_4(%arg0: i32) -> (i32, i32) {
    %c0_i32 = arith.constant 0 : i32
    %c0_i32_0 = arith.constant 0 : i32
    %c0_i32_1 = arith.constant 0 : i32
    return %c0_i32, %c0_i32_0 : i32, i32
  }
  func.func @transform_5(%arg0: i32) -> (i32, i32) {
    %c0_i32 = arith.constant 0 : i32
    %c0_i32_0 = arith.constant 0 : i32
    %c0_i32_1 = arith.constant 0 : i32
    return %c0_i32, %c0_i32_0 : i32, i32
  }
  func.func @transform_6(%arg0: i32) -> (i32, i32) {
    %c0_i32 = arith.constant 0 : i32
    %c0_i32_0 = arith.constant 0 : i32
    %c0_i32_1 = arith.constant 0 : i32
    return %c0_i32, %c0_i32_0 : i32, i32
  }
  func.func @transform_7(%arg0: i32) -> (i32, i32) {
    %c0_i32 = arith.constant 0 : i32
    %c0_i32_0 = arith.constant 0 : i32
    return %c0_i32, %arg0 : i32, i32
  }
}

</mosaic_0001>

<llo_original>
// kernel: model3_forward.1
$region0: #{model3_forward.1}
  #allocation0 [shape = 'u32[]', space=smem, size = 0x4, offset = 0x4, fixed_abs, tag = 'smem constant byte address 0x4 - core index']
  #allocation1 [shape = 'u32[144,128]{1,0:T(1,128)}', space=vmem, size = 0x12000, scoped, tag = 'internal scratch']
  #allocation2 [shape = 'f32[1,1]{1,0:T(1,128)S(6)}', space=smem, size = 0x200, scoped, tag = 'scoped memory for model3_forward.1']
  %s0 = inlined_call_operand.vmem [shape: f32[1,1024], index: 0, kind: input, shape index: {}]
  %s1 = inlined_call_operand.vmem [shape: f32[32,1], index: 1, kind: input, shape index: {}]
  %s2 = inlined_call_operand.vmem [shape: f32[32,1], index: 2, kind: input, shape index: {}]
  %s3 = inlined_call_operand.vmem [shape: f32[64,32], index: 3, kind: input, shape index: {}]
  %s4 = inlined_call_operand.vmem [shape: f32[64,1], index: 4, kind: input, shape index: {}]
  %s5 = inlined_call_operand.vmem [shape: f32[64,1], index: 5, kind: input, shape index: {}]
  %s6 = inlined_call_operand.<no memory space> [shape: f32[1,1], index: 6, kind: input, shape index: {}]
  %s7 = inlined_call_operand.vmem [shape: f32[1,1024], index: 7, kind: output, shape index: {}]
  %s8 = sld [smem:[#allocation0]]
  $region61: #{model3_forward.1} parent=0
    _
  %s10 = ssub.s32 1, %s8
  %s11 = scalar_select 0, %s10, %s8
  %12 = sst [smem:[#allocation2]] %s6
  loop: start=0, step=1, limit=4
  $region2: #{model3_forward.1} parent=0 // loop_pre_header
    _
  $region3: #{model3_forward.1} parent=0 // loop_header
    %s14 = sphi 0, %s18
    %p15 = scmp.ge.s32.totalorder %s14, 4
    %s24 = sphi 0, %s26
    %s27 = sphi 0, %s24
    %s28 = sphi 0, %s27
    %s44 = sphi 0, %s28
    %s48 = sphi 0, %s48
    %s50 = sphi 0, %s48
    %s51 = sphi 0, %s50
    %s65 = sphi 0, %s51
    %s69 = sphi 0, %s69
    %s71 = sphi 0, %s69
    %s72 = sphi 0, %s71
    %s86 = sphi 0, %s72
    %s90 = sphi 0, %s90
    %s92 = sphi 0, %s90
    %s93 = sphi 0, %s92
    %s107 = sphi 0, %s93
    %s111 = sphi 0, %s111
    %s113 = sphi 0, %s111
    %s114 = sphi 0, %s113
    %s128 = sphi 0, %s114
    %s132 = sphi 0, %s132
    %s134 = sphi 0, %s132
    %s135 = sphi 0, %s134
    %s149 = sphi 0, %s135
    %s153 = sphi 0, %s153
    %s155 = sphi 0, %s153
    %s156 = sphi 0, %s155
    %s170 = sphi 0, %s156
    %s176 = sphi 0, %s178
    %s179 = sphi 0, %s176
    %s180 = sphi 0, %s179
    %s196 = sphi 0, %s180
  $region4: #{model3_forward.1} parent=0 // loop_header_branch
    %17 = sbr.rel (%p15) target = $region8
  $region5: #{model3_forward.1} parent=0 // loop_body
    %s19 = ssub.s32 %s14, 1
    %s20 = ssub.s32 %s14, 2
    %s21 = sadd.s32 %s14, 1
    %s22 = ssub.s32 %s14, %s21
    %p23 = scmp.eq.s32.totalorder %s22, 0
    %s25 = sadd.s32 %s24, 1
    %s26 = scalar_select %p23, %s24, %s25
    %p29 = pneg %p23
    %p30 = scmp.eq.s32.totalorder %s14, 1
    %p31 = por %p29, %p30
    %p32 = scmp.ne.s32.totalorder %s24, %s27
    %p33 = scmp.eq.s32.totalorder %s14, 0
    %p34 = por %p32, %p33
    %p35 = scmp.ne.s32.totalorder %s24, %s27
    %p36 = scmp.eq.s32.totalorder %s19, 1
    %p37 = por %p35, %p36
    %p38 = scmp.ne.s32.totalorder %s27, %s28
    %p39 = scmp.eq.s32.totalorder %s19, 0
    %p40 = por %p38, %p39
    %p41 = scmp.ne.s32.totalorder %s27, %s28
    %p42 = scmp.eq.s32.totalorder %s20, 1
    %p43 = por %p41, %p42
    %p45 = scmp.ne.s32.totalorder %s28, %s44
    %p46 = scmp.eq.s32.totalorder %s20, 0
    %p47 = por %p45, %p46
    %s49 = sadd.s32 %s48, 1
    %p52 = scmp.eq.s32.totalorder %s14, 1
    %p53 = scmp.ne.s32.totalorder %s48, %s50
    %p54 = scmp.eq.s32.totalorder %s14, 0
    %p55 = por %p53, %p54
    %p56 = scmp.ne.s32.totalorder %s48, %s50
    %p57 = scmp.eq.s32.totalorder %s19, 1
    %p58 = por %p56, %p57
    %p59 = scmp.ne.s32.totalorder %s50, %s51
    %p60 = scmp.eq.s32.totalorder %s19, 0
    %p61 = por %p59, %p60
    %p62 = scmp.ne.s32.totalorder %s50, %s51
    %p63 = scmp.eq.s32.totalorder %s20, 1
    %p64 = por %p62, %p63
    %p66 = scmp.ne.s32.totalorder %s51, %s65
    %p67 = scmp.eq.s32.totalorder %s20, 0
    %p68 = por %p66, %p67
    %s70 = sadd.s32 %s69, 1
    %p73 = scmp.eq.s32.totalorder %s14, 1
    %p74 = scmp.ne.s32.totalorder %s69, %s71
    %p75 = scmp.eq.s32.totalorder %s14, 0
    %p76 = por %p74, %p75
    %p77 = scmp.ne.s32.totalorder %s69, %s71
    %p78 = scmp.eq.s32.totalorder %s19, 1
    %p79 = por %p77, %p78
    %p80 = scmp.ne.s32.totalorder %s71, %s72
    %p81 = scmp.eq.s32.totalorder %s19, 0
    %p82 = por %p80, %p81
    %p83 = scmp.ne.s32.totalorder %s71, %s72
    %p84 = scmp.eq.s32.totalorder %s20, 1
    %p85 = por %p83, %p84
    %p87 = scmp.ne.s32.totalorder %s72, %s86
    %p88 = scmp.eq.s32.totalorder %s20, 0
    %p89 = por %p87, %p88
    %s91 = sadd.s32 %s90, 1
    %p94 = scmp.eq.s32.totalorder %s14, 1
    %p95 = scmp.ne.s32.totalorder %s90, %s92
    %p96 = scmp.eq.s32.totalorder %s14, 0
    %p97 = por %p95, %p96
    %p98 = scmp.ne.s32.totalorder %s90, %s92
    %p99 = scmp.eq.s32.totalorder %s19, 1
    %p100 = por %p98, %p99
    %p101 = scmp.ne.s32.totalorder %s92, %s93
    %p102 = scmp.eq.s32.totalorder %s19, 0
    %p103 = por %p101, %p102
    %p104 = scmp.ne.s32.totalorder %s92, %s93
    %p105 = scmp.eq.s32.totalorder %s20, 1
    %p106 = por %p104, %p105
    %p108 = scmp.ne.s32.totalorder %s93, %s107
    %p109 = scmp.eq.s32.totalorder %s20, 0
    %p110 = por %p108, %p109
    %s112 = sadd.s32 %s111, 1
    %p115 = scmp.eq.s32.totalorder %s14, 1
    %p116 = scmp.ne.s32.totalorder %s111, %s113
    %p117 = scmp.eq.s32.totalorder %s14, 0
    %p118 = por %p116, %p117
    %p119 = scmp.ne.s32.totalorder %s111, %s113
    %p120 = scmp.eq.s32.totalorder %s19, 1
    %p121 = por %p119, %p120
    %p122 = scmp.ne.s32.totalorder %s113, %s114
    %p123 = scmp.eq.s32.totalorder %s19, 0
    %p124 = por %p122, %p123
    %p125 = scmp.ne.s32.totalorder %s113, %s114
    %p126 = scmp.eq.s32.totalorder %s20, 1
    %p127 = por %p125, %p126
    %p129 = scmp.ne.s32.totalorder %s114, %s128
    %p130 = scmp.eq.s32.totalorder %s20, 0
    %p131 = por %p129, %p130
    %s133 = sadd.s32 %s132, 1
    %p136 = scmp.eq.s32.totalorder %s14, 1
    %p137 = scmp.ne.s32.totalorder %s132, %s134
    %p138 = scmp.eq.s32.totalorder %s14, 0
    %p139 = por %p137, %p138
    %p140 = scmp.ne.s32.totalorder %s132, %s134
    %p141 = scmp.eq.s32.totalorder %s19, 1
    %p142 = por %p140, %p141
    %p143 = scmp.ne.s32.totalorder %s134, %s135
    %p144 = scmp.eq.s32.totalorder %s19, 0
    %p145 = por %p143, %p144
    %p146 = scmp.ne.s32.totalorder %s134, %s135
    %p147 = scmp.eq.s32.totalorder %s20, 1
    %p148 = por %p146, %p147
    %p150 = scmp.ne.s32.totalorder %s135, %s149
    %p151 = scmp.eq.s32.totalorder %s20, 0
    %p152 = por %p150, %p151
    %s154 = sadd.s32 %s153, 1
    %p157 = scmp.eq.s32.totalorder %s14, 1
    %p158 = scmp.ne.s32.totalorder %s153, %s155
    %p159 = scmp.eq.s32.totalorder %s14, 0
    %p160 = por %p158, %p159
    %p161 = scmp.ne.s32.totalorder %s153, %s155
    %p162 = scmp.eq.s32.totalorder %s19, 1
    %p163 = por %p161, %p162
    %p164 = scmp.ne.s32.totalorder %s155, %s156
    %p165 = scmp.eq.s32.totalorder %s19, 0
    %p166 = por %p164, %p165
    %p167 = scmp.ne.s32.totalorder %s155, %s156
    %p168 = scmp.eq.s32.totalorder %s20, 1
    %p169 = por %p167, %p168
    %p171 = scmp.ne.s32.totalorder %s156, %s170
    %p172 = scmp.eq.s32.totalorder %s20, 0
    %p173 = por %p171, %p172
    %s174 = ssub.s32 %s14, %s21
    %p175 = scmp.eq.s32.totalorder %s174, 0
    %s177 = sadd.s32 %s176, 1
    %s178 = scalar_select %p175, %s176, %s177
    %p181 = pneg %p175
    %p182 = scmp.eq.s32.totalorder %s14, 1
    %p183 = por %p181, %p182
    %p184 = scmp.ne.s32.totalorder %s176, %s179
    %p185 = scmp.eq.s32.totalorder %s14, 0
    %p186 = por %p184, %p185
    %p187 = scmp.ne.s32.totalorder %s176, %s179
    %p188 = scmp.eq.s32.totalorder %s19, 1
    %p189 = por %p187, %p188
    %p190 = scmp.ne.s32.totalorder %s179, %s180
    %p191 = scmp.eq.s32.totalorder %s19, 0
    %p192 = por %p190, %p191
    %p193 = scmp.ne.s32.totalorder %s179, %s180
    %p194 = scmp.eq.s32.totalorder %s20, 1
    %p195 = por %p193, %p194
    %p197 = scmp.ne.s32.totalorder %s180, %s196
    %p198 = scmp.eq.s32.totalorder %s20, 0
    %p199 = por %p197, %p198
    %p200 = scmp.le.s32.totalorder 1, %s14
    %p201 = scmp.lt.s32.totalorder %s14, 3
    %p202 = pnand %p200, %p201
    %p203 = pneg %p202
    // Predicated region
    $region9: #{model3_forward.1} parent=5 // pred_check
      _
    $region10: #{model3_forward.1} parent=5 // pred_check_branch
      %205 = sbr.rel (%p202) target = $region12
    $region11: #{model3_forward.1} parent=5 // pred_region
      %s206 = ssub.s32 %s14, 1
      // Predicated region
      $region13: #{model3_forward.1} parent=11 // pred_check
        %p207 = pneg %p61
      $region14: #{model3_forward.1} parent=11 // pred_check_branch
        %209 = sbr.rel (%p207) target = $region16
      $region15: #{model3_forward.1} parent=11 // pred_region
        _
      $region16: #{model3_forward.1} parent=11 // pred_fallthru
        _
      // Predicated region
      $region17: #{model3_forward.1} parent=11 // pred_check
        %p210 = pneg %p82
      $region18: #{model3_forward.1} parent=11 // pred_check_branch
        %212 = sbr.rel (%p210) target = $region20
      $region19: #{model3_forward.1} parent=11 // pred_region
        _
      $region20: #{model3_forward.1} parent=11 // pred_fallthru
        _
      // Predicated region
      $region21: #{model3_forward.1} parent=11 // pred_check
        %p213 = pneg %p103
      $region22: #{model3_forward.1} parent=11 // pred_check_branch
        %215 = sbr.rel (%p213) target = $region24
      $region23: #{model3_forward.1} parent=11 // pred_region
        _
      $region24: #{model3_forward.1} parent=11 // pred_fallthru
        _
      // Predicated region
      $region25: #{model3_forward.1} parent=11 // pred_check
        %p216 = pneg %p124
      $region26: #{model3_forward.1} parent=11 // pred_check_branch
        %218 = sbr.rel (%p216) target = $region28
      $region27: #{model3_forward.1} parent=11 // pred_region
        _
      $region28: #{model3_forward.1} parent=11 // pred_fallthru
        _
      // Predicated region
      $region29: #{model3_forward.1} parent=11 // pred_check
        %p219 = pneg %p145
      $region30: #{model3_forward.1} parent=11 // pred_check_branch
        %221 = sbr.rel (%p219) target = $region32
      $region31: #{model3_forward.1} parent=11 // pred_region
        _
      $region32: #{model3_forward.1} parent=11 // pred_fallthru
        _
      // Predicated region
      $region33: #{model3_forward.1} parent=11 // pred_check
        %p222 = pneg %p166
      $region34: #{model3_forward.1} parent=11 // pred_check_branch
        %224 = sbr.rel (%p222) target = $region36
      $region35: #{model3_forward.1} parent=11 // pred_region
        _
      $region36: #{model3_forward.1} parent=11 // pred_fallthru
        _
    $region12: #{model3_forward.1} parent=5 // pred_fallthru
      _
    %p225 = scmp.lt.s32.totalorder %s14, 2
    // Predicated region
    $region37: #{model3_forward.1} parent=5 // pred_check
      %p226 = pneg %p225
    $region38: #{model3_forward.1} parent=5 // pred_check_branch
      %228 = sbr.rel (%p226) target = $region40
    $region39: #{model3_forward.1} parent=5 // pred_region
      // Predicated region
      $region41: #{model3_forward.1} parent=39 // pred_check
        %p229 = pneg %p34
      $region42: #{model3_forward.1} parent=39 // pred_check_branch
        %231 = sbr.rel (%p229) target = $region44
      $region43: #{model3_forward.1} parent=39 // pred_region
        %s232 = smul.u32 4, %s14
        %p233 = scmp.lt.s32.totalorder %s232, 7
        %s234 = scalar_select %p233, %s232, 7
        %s235 = scalar_lea.vmem %s0, %s234
        %s236 = smul.u32 4, %s14
      $region44: #{model3_forward.1} parent=39 // pred_fallthru
        _
    $region40: #{model3_forward.1} parent=5 // pred_fallthru
      _
    %p237 = scmp.le.s32.totalorder 1, %s14
    %p238 = scmp.lt.s32.totalorder %s14, 3
    %p239 = pnand %p237, %p238
    %p240 = pneg %p239
    // Predicated region
    $region45: #{model3_forward.1} parent=5 // pred_check
      _
    $region46: #{model3_forward.1} parent=5 // pred_check_branch
      %242 = sbr.rel (%p239) target = $region48
    $region47: #{model3_forward.1} parent=5 // pred_region
      %s243 = ssub.s32 %s14, 1
      %s244 = smul.u32 4, %s19
      %p245 = scmp.lt.s32.totalorder %s244, 7
      %s246 = scalar_select %p245, %s244, 7
      %s247 = scalar_lea.vmem %s0, %s246
      %p248 = pneg %p40
      %p249 = pneg %p37
      %p250 = pneg %p61
      %p251 = pneg %p58
      %p252 = pneg %p82
      %p253 = pneg %p79
      %p254 = pneg %p103
      %p255 = pneg %p100
      %p256 = pneg %p124
      %p257 = pneg %p121
      %p258 = pneg %p145
      %p259 = pneg %p142
      %p260 = pneg %p166
      %p261 = pneg %p163
      %p262 = pneg %p192
      %p263 = pneg %p189
      %s264 = smul.u32 4, %s19
      %p265 = scmp.lt.s32.totalorder %s264, 7
      %s266 = scalar_select %p265, %s264, 7
      %s267 = scalar_lea.vmem %s7, %s266
      %s268 = smul.u32 4, %s19
      %p269 = scmp.lt.s32.totalorder %s268, 7
      %s270 = scalar_select %p269, %s268, 7
      %s271 = scalar_lea.vmem %s0, %s270
      %s272 = smul.u32 4, %s19
      %s273 = smul.u32 4, %s19
      %p274 = scmp.lt.s32.totalorder %s273, 7
      %s275 = scalar_select %p274, %s273, 7
      %s276 = scalar_lea.vmem %s7, %s275
      %s277 = smul.u32 4, %s19
      %v278 = vld [vmem:[%s271] sm:$0xf]
      %v279 = vld [vmem:[%s1] sm:$0xff]
      %v280 = vld [vmem:[%s1 + $0x8] sm:$0xff]
      %v281 = vld [vmem:[%s1 + $0x10] sm:$0xff]
      %v282 = vld [vmem:[%s1 + $0x18] sm:$0xff]
      %284 = vset.pattern.permute.xlu0 0
      %285 = vperm.xlu0 %284, %v279
      %v286 = vpop.permute.xlu0 %285
      %289 = vset.pattern.permute.xlu0 0
      %290 = vperm.xlu0 %289, %v280
      %v291 = vpop.permute.xlu0 %290
      %294 = vset.pattern.permute.xlu0 0
      %295 = vperm.xlu0 %294, %v281
      %v296 = vpop.permute.xlu0 %295
      %299 = vset.pattern.permute.xlu0 0
      %300 = vperm.xlu0 %299, %v282
      %v301 = vpop.permute.xlu0 %300
      %v304 = vlaneseq
      %v305 = vshrl.u32 %v304, 7
      %v306 = vsub.s32 0, %v305
      %v307 = vrot.slane %v278, %v306
      %v308 = vlaneseq
      %v309 = vshrl.u32 %v308, 7
      %v310 = vsub.s32 1, %v309
      %v311 = vrot.slane %v278, %v310
      %v312 = vlaneseq
      %v313 = vshrl.u32 %v312, 7
      %v314 = vsub.s32 2, %v313
      %v315 = vrot.slane %v278, %v314
      %v316 = vlaneseq
      %v317 = vshrl.u32 %v316, 7
      %v318 = vsub.s32 3, %v317
      %v319 = vrot.slane %v278, %v318
      %v324 = vmul.f32 %v286, %v307
      %v325 = vmul.f32 %v286, %v311
      %v326 = vmul.f32 %v286, %v315
      %v327 = vmul.f32 %v286, %v319
      %v328 = vmul.f32 %v291, %v307
      %v329 = vmul.f32 %v291, %v311
      %v330 = vmul.f32 %v291, %v315
      %v331 = vmul.f32 %v291, %v319
      %v332 = vmul.f32 %v296, %v307
      %v333 = vmul.f32 %v296, %v311
      %v334 = vmul.f32 %v296, %v315
      %v335 = vmul.f32 %v296, %v319
      %v336 = vmul.f32 %v301, %v307
      %v337 = vmul.f32 %v301, %v311
      %v338 = vmul.f32 %v301, %v315
      %v339 = vmul.f32 %v301, %v319
      %v340 = vld [vmem:[%s2] sm:$0xff]
      %v341 = vld [vmem:[%s2 + $0x8] sm:$0xff]
      %v342 = vld [vmem:[%s2 + $0x10] sm:$0xff]
      %v343 = vld [vmem:[%s2 + $0x18] sm:$0xff]
      %345 = vset.pattern.permute.xlu0 0
      %346 = vperm.xlu0 %345, %v340
      %v347 = vpop.permute.xlu0 %346
      %350 = vset.pattern.permute.xlu0 0
      %351 = vperm.xlu0 %350, %v341
      %v352 = vpop.permute.xlu0 %351
      %355 = vset.pattern.permute.xlu0 0
      %356 = vperm.xlu0 %355, %v342
      %v357 = vpop.permute.xlu0 %356
      %360 = vset.pattern.permute.xlu0 0
      %361 = vperm.xlu0 %360, %v343
      %v362 = vpop.permute.xlu0 %361
      %v364 = vadd.f32 %v324, %v347
      %v365 = vadd.f32 %v325, %v347
      %v366 = vadd.f32 %v326, %v347
      %v367 = vadd.f32 %v327, %v347
      %v368 = vadd.f32 %v328, %v352
      %v369 = vadd.f32 %v329, %v352
      %v370 = vadd.f32 %v330, %v352
      %v371 = vadd.f32 %v331, %v352
      %v372 = vadd.f32 %v332, %v357
      %v373 = vadd.f32 %v333, %v357
      %v374 = vadd.f32 %v334, %v357
      %v375 = vadd.f32 %v335, %v357
      %v376 = vadd.f32 %v336, %v362
      %v377 = vadd.f32 %v337, %v362
      %v378 = vadd.f32 %v338, %v362
      %v379 = vadd.f32 %v339, %v362
      %v380 = vmax.f32 %v364, 0.0
      %v381 = vmax.f32 %v365, 0.0
      %v382 = vmax.f32 %v366, 0.0
      %v383 = vmax.f32 %v367, 0.0
      %v384 = vmax.f32 %v368, 0.0
      %v385 = vmax.f32 %v369, 0.0
      %v386 = vmax.f32 %v370, 0.0
      %v387 = vmax.f32 %v371, 0.0
      %v388 = vmax.f32 %v372, 0.0
      %v389 = vmax.f32 %v373, 0.0
      %v390 = vmax.f32 %v374, 0.0
      %v391 = vmax.f32 %v375, 0.0
      %v392 = vmax.f32 %v376, 0.0
      %v393 = vmax.f32 %v377, 0.0
      %v394 = vmax.f32 %v378, 0.0
      %v395 = vmax.f32 %v379, 0.0
      %v396 = vld [vmem:[%s3] sm:$0xff]
      %v397 = vld [vmem:[%s3 + $0x8] sm:$0xff]
      %v398 = vld [vmem:[%s3 + $0x10] sm:$0xff]
      %v399 = vld [vmem:[%s3 + $0x18] sm:$0xff]
      %v400 = vld [vmem:[%s3 + $0x20] sm:$0xff]
      %v401 = vld [vmem:[%s3 + $0x28] sm:$0xff]
      %v402 = vld [vmem:[%s3 + $0x30] sm:$0xff]
      %v403 = vld [vmem:[%s3 + $0x38] sm:$0xff]
      %v404 = vld [vmem:[%s4] sm:$0xff]
      %v405 = vld [vmem:[%s4 + $0x8] sm:$0xff]
      %v406 = vld [vmem:[%s4 + $0x10] sm:$0xff]
      %v407 = vld [vmem:[%s4 + $0x18] sm:$0xff]
      %v408 = vld [vmem:[%s4 + $0x20] sm:$0xff]
      %v409 = vld [vmem:[%s4 + $0x28] sm:$0xff]
      %v410 = vld [vmem:[%s4 + $0x30] sm:$0xff]
      %v411 = vld [vmem:[%s4 + $0x38] sm:$0xff]
      %413 = vset.pattern.permute.xlu0 0
      %414 = vperm.xlu0 %413, %v404
      %v415 = vpop.permute.xlu0 %414
      %418 = vset.pattern.permute.xlu0 0
      %419 = vperm.xlu0 %418, %v405
      %v420 = vpop.permute.xlu0 %419
      %423 = vset.pattern.permute.xlu0 0
      %424 = vperm.xlu0 %423, %v406
      %v425 = vpop.permute.xlu0 %424
      %428 = vset.pattern.permute.xlu0 0
      %429 = vperm.xlu0 %428, %v407
      %v430 = vpop.permute.xlu0 %429
      %433 = vset.pattern.permute.xlu0 0
      %434 = vperm.xlu0 %433, %v408
      %v435 = vpop.permute.xlu0 %434
      %438 = vset.pattern.permute.xlu0 0
      %439 = vperm.xlu0 %438, %v409
      %v440 = vpop.permute.xlu0 %439
      %443 = vset.pattern.permute.xlu0 0
      %444 = vperm.xlu0 %443, %v410
      %v445 = vpop.permute.xlu0 %444
      %448 = vset.pattern.permute.xlu0 0
      %449 = vperm.xlu0 %448, %v411
      %v450 = vpop.permute.xlu0 %449
      %vm452 = vcmask 261120
      %v454 = vsel %vm452, %v396, 0
      %v457 = vsel %vm452, %v397, 0
      %v460 = vsel %vm452, %v398, 0
      %v463 = vsel %vm452, %v399, 0
      %v466 = vsel %vm452, %v400, 0
      %v469 = vsel %vm452, %v401, 0
      %v472 = vsel %vm452, %v402, 0
      %v475 = vsel %vm452, %v403, 0
      %477 = vmatprep.subr.mxu0 0.0
      %478 = vmatpush1.msra.mxu0 0.0
      %479 = vmatprep.subr.mxu0 0.0
      %480 = vmatpush1.msra.mxu0 0.0
      %481 = vmatprep.subr.mxu0 0.0
      %482 = vmatpush1.msra.mxu0 0.0
      %483 = vmatprep.subr.mxu0 0.0
      %484 = vmatpush1.msra.mxu0 0.0
      %485 = vmatprep.subr.mxu0 0.0
      %486 = vmatpush1.msra.mxu0 0.0
      %487 = vmatprep.subr.mxu0 0.0
      %488 = vmatpush1.msra.mxu0 0.0
      %489 = vmatprep.subr.mxu0 0.0
      %490 = vmatpush1.msra.mxu0 0.0
      %491 = vmatprep.subr.mxu0 0.0
      %492 = vmatpush1.msra.mxu0 0.0
      %493 = vmatprep.subr.mxu0 0.0
      %494 = vmatpush1.msra.mxu0 0.0
      %495 = vmatprep.subr.mxu0 0.0
      %496 = vmatpush1.msra.mxu0 0.0
      %497 = vmatprep.subr.mxu0 0.0
      %498 = vmatpush1.msra.mxu0 0.0
      %499 = vmatprep.subr.mxu0 0.0
      %500 = vmatpush1.msra.mxu0 0.0
      %501 = vmatprep.subr.mxu0 %v393
      %502 = vmatpush1.msra.mxu0 %v392
      %503 = vmatprep.subr.mxu0 %v389
      %504 = vmatpush1.msra.mxu0 %v388
      %505 = vmatprep.subr.mxu0 %v385
      %506 = vmatpush1.msra.mxu0 %v384
      %507 = vmatprep.subr.mxu0 %v381
      %508 = vmatpush1.msra.mxu0 %v380
      %509 = vmatprep.subr.mxu0 0.0
      %510 = vmatpush2.msra.mxu0 0.0
      %511 = vmatprep.subr.mxu0 0.0
      %512 = vmatpush2.msra.mxu0 0.0
      %513 = vmatprep.subr.mxu0 0.0
      %514 = vmatpush2.msra.mxu0 0.0
      %515 = vmatprep.subr.mxu0 0.0
      %516 = vmatpush2.msra.mxu0 0.0
      %517 = vmatprep.subr.mxu0 0.0
      %518 = vmatpush2.msra.mxu0 0.0
      %519 = vmatprep.subr.mxu0 0.0
      %520 = vmatpush2.msra.mxu0 0.0
      %521 = vmatprep.subr.mxu0 0.0
      %522 = vmatpush2.msra.mxu0 0.0
      %523 = vmatprep.subr.mxu0 0.0
      %524 = vmatpush2.msra.mxu0 0.0
      %525 = vmatprep.subr.mxu0 0.0
      %526 = vmatpush2.msra.mxu0 0.0
      %527 = vmatprep.subr.mxu0 0.0
      %528 = vmatpush2.msra.mxu0 0.0
      %529 = vmatprep.subr.mxu0 0.0
      %530 = vmatpush2.msra.mxu0 0.0
      %531 = vmatprep.subr.mxu0 0.0
      %532 = vmatpush2.msra.mxu0 0.0
      %533 = vmatprep.subr.mxu0 0.0
      %534 = vmatpush2.msra.mxu0 0.0
      %535 = vmatprep.subr.mxu0 0.0
      %536 = vmatpush2.msra.mxu0 0.0
      %537 = vmatprep.subr.mxu0 0.0
      %538 = vmatpush2.msra.mxu0 0.0
      %539 = vmatprep.subr.mxu0 0.0
      %540 = vmatpush2.msra.mxu0 0.0
      %541 = vmatprep.mubr.f32.mxu0 0.0
      %542 = vmatmul.mubr.f32.gmra.mxu0 %v454
      %v543 = vpop.f32.mrf.mxu0
      %v544 = vadd.f32 %v415, %v543
      %v545 = vpop.f32.mrf.mxu0
      %v546 = vadd.f32 %v415, %v545
      %547 = vmatprep.mubr.f32.mxu0 0.0
      %548 = vmatmul.mubr.f32.gmra.mxu0 %v457
      %v549 = vpop.f32.mrf.mxu0
      %v550 = vadd.f32 %v420, %v549
      %v551 = vpop.f32.mrf.mxu0
      %v552 = vadd.f32 %v420, %v551
      %553 = vmatprep.mubr.f32.mxu0 0.0
      %554 = vmatmul.mubr.f32.gmra.mxu0 %v460
      %v555 = vpop.f32.mrf.mxu0
      %v556 = vadd.f32 %v425, %v555
      %v557 = vpop.f32.mrf.mxu0
      %v558 = vadd.f32 %v425, %v557
      %559 = vmatprep.mubr.f32.mxu0 0.0
      %560 = vmatmul.mubr.f32.gmra.mxu0 %v463
      %v561 = vpop.f32.mrf.mxu0
      %v562 = vadd.f32 %v430, %v561
      %v563 = vpop.f32.mrf.mxu0
      %v564 = vadd.f32 %v430, %v563
      %565 = vmatprep.mubr.f32.mxu0 0.0
      %566 = vmatmul.mubr.f32.gmra.mxu0 %v466
      %v567 = vpop.f32.mrf.mxu0
      %v568 = vadd.f32 %v435, %v567
      %v569 = vpop.f32.mrf.mxu0
      %v570 = vadd.f32 %v435, %v569
      %571 = vmatprep.mubr.f32.mxu0 0.0
      %572 = vmatmul.mubr.f32.gmra.mxu0 %v469
      %v573 = vpop.f32.mrf.mxu0
      %v574 = vadd.f32 %v440, %v573
      %v575 = vpop.f32.mrf.mxu0
      %v576 = vadd.f32 %v440, %v575
      %577 = vmatprep.mubr.f32.mxu0 0.0
      %578 = vmatmul.mubr.f32.gmra.mxu0 %v472
      %v579 = vpop.f32.mrf.mxu0
      %v580 = vadd.f32 %v445, %v579
      %v581 = vpop.f32.mrf.mxu0
      %v582 = vadd.f32 %v445, %v581
      %583 = vmatprep.mubr.f32.mxu0 0.0
      %584 = vmatmul.mubr.f32.gmra.mxu0 %v475
      %v585 = vpop.f32.mrf.mxu0
      %v586 = vadd.f32 %v450, %v585
      %v587 = vpop.f32.mrf.mxu0
      %v588 = vadd.f32 %v450, %v587
      %589 = vdwg.mxu0
      %590 = vmatprep.subr.mxu0 0.0
      %591 = vmatpush1.msra.mxu0 0.0
      %592 = vmatprep.subr.mxu0 0.0
      %593 = vmatpush1.msra.mxu0 0.0
      %594 = vmatprep.subr.mxu0 0.0
      %595 = vmatpush1.msra.mxu0 0.0
      %596 = vmatprep.subr.mxu0 0.0
      %597 = vmatpush1.msra.mxu0 0.0
      %598 = vmatprep.subr.mxu0 0.0
      %599 = vmatpush1.msra.mxu0 0.0
      %600 = vmatprep.subr.mxu0 0.0
      %601 = vmatpush1.msra.mxu0 0.0
      %602 = vmatprep.subr.mxu0 0.0
      %603 = vmatpush1.msra.mxu0 0.0
      %604 = vmatprep.subr.mxu0 0.0
      %605 = vmatpush1.msra.mxu0 0.0
      %606 = vmatprep.subr.mxu0 0.0
      %607 = vmatpush1.msra.mxu0 0.0
      %608 = vmatprep.subr.mxu0 0.0
      %609 = vmatpush1.msra.mxu0 0.0
      %610 = vmatprep.subr.mxu0 0.0
      %611 = vmatpush1.msra.mxu0 0.0
      %612 = vmatprep.subr.mxu0 0.0
      %613 = vmatpush1.msra.mxu0 0.0
      %614 = vmatprep.subr.mxu0 %v395
      %615 = vmatpush1.msra.mxu0 %v394
      %616 = vmatprep.subr.mxu0 %v391
      %617 = vmatpush1.msra.mxu0 %v390
      %618 = vmatprep.subr.mxu0 %v387
      %619 = vmatpush1.msra.mxu0 %v386
      %620 = vmatprep.subr.mxu0 %v383
      %621 = vmatpush1.msra.mxu0 %v382
      %622 = vmatprep.subr.mxu0 0.0
      %623 = vmatpush2.msra.mxu0 0.0
      %624 = vmatprep.subr.mxu0 0.0
      %625 = vmatpush2.msra.mxu0 0.0
      %626 = vmatprep.subr.mxu0 0.0
      %627 = vmatpush2.msra.mxu0 0.0
      %628 = vmatprep.subr.mxu0 0.0
      %629 = vmatpush2.msra.mxu0 0.0
      %630 = vmatprep.subr.mxu0 0.0
      %631 = vmatpush2.msra.mxu0 0.0
      %632 = vmatprep.subr.mxu0 0.0
      %633 = vmatpush2.msra.mxu0 0.0
      %634 = vmatprep.subr.mxu0 0.0
      %635 = vmatpush2.msra.mxu0 0.0
      %636 = vmatprep.subr.mxu0 0.0
      %637 = vmatpush2.msra.mxu0 0.0
      %638 = vmatprep.subr.mxu0 0.0
      %639 = vmatpush2.msra.mxu0 0.0
      %640 = vmatprep.subr.mxu0 0.0
      %641 = vmatpush2.msra.mxu0 0.0
      %642 = vmatprep.subr.mxu0 0.0
      %643 = vmatpush2.msra.mxu0 0.0
      %644 = vmatprep.subr.mxu0 0.0
      %645 = vmatpush2.msra.mxu0 0.0
      %646 = vmatprep.subr.mxu0 0.0
      %647 = vmatpush2.msra.mxu0 0.0
      %648 = vmatprep.subr.mxu0 0.0
      %649 = vmatpush2.msra.mxu0 0.0
      %650 = vmatprep.subr.mxu0 0.0
      %651 = vmatpush2.msra.mxu0 0.0
      %652 = vmatprep.subr.mxu0 0.0
      %653 = vmatpush2.msra.mxu0 0.0
      %654 = vmatprep.mubr.f32.mxu0 0.0
      %655 = vmatmul.mubr.f32.gmra.mxu0 %v454
      %v656 = vpop.f32.mrf.mxu0
      %v657 = vadd.f32 %v415, %v656
      %v658 = vpop.f32.mrf.mxu0
      %v659 = vadd.f32 %v415, %v658
      %660 = vmatprep.mubr.f32.mxu0 0.0
      %661 = vmatmul.mubr.f32.gmra.mxu0 %v457
      %v662 = vpop.f32.mrf.mxu0
      %v663 = vadd.f32 %v420, %v662
      %v664 = vpop.f32.mrf.mxu0
      %v665 = vadd.f32 %v420, %v664
      %666 = vmatprep.mubr.f32.mxu0 0.0
      %667 = vmatmul.mubr.f32.gmra.mxu0 %v460
      %v668 = vpop.f32.mrf.mxu0
      %v669 = vadd.f32 %v425, %v668
      %v670 = vpop.f32.mrf.mxu0
      %v671 = vadd.f32 %v425, %v670
      %672 = vmatprep.mubr.f32.mxu0 0.0
      %673 = vmatmul.mubr.f32.gmra.mxu0 %v463
      %v674 = vpop.f32.mrf.mxu0
      %v675 = vadd.f32 %v430, %v674
      %v676 = vpop.f32.mrf.mxu0
      %v677 = vadd.f32 %v430, %v676
      %678 = vmatprep.mubr.f32.mxu0 0.0
      %679 = vmatmul.mubr.f32.gmra.mxu0 %v466
      %v680 = vpop.f32.mrf.mxu0
      %v681 = vadd.f32 %v435, %v680
      %v682 = vpop.f32.mrf.mxu0
      %v683 = vadd.f32 %v435, %v682
      %684 = vmatprep.mubr.f32.mxu0 0.0
      %685 = vmatmul.mubr.f32.gmra.mxu0 %v469
      %v686 = vpop.f32.mrf.mxu0
      %v687 = vadd.f32 %v440, %v686
      %v688 = vpop.f32.mrf.mxu0
      %v689 = vadd.f32 %v440, %v688
      %690 = vmatprep.mubr.f32.mxu0 0.0
      %691 = vmatmul.mubr.f32.gmra.mxu0 %v472
      %v692 = vpop.f32.mrf.mxu0
      %v693 = vadd.f32 %v445, %v692
      %v694 = vpop.f32.mrf.mxu0
      %v695 = vadd.f32 %v445, %v694
      %696 = vmatprep.mubr.f32.mxu0 0.0
      %697 = vmatmul.mubr.f32.gmra.mxu0 %v475
      %v698 = vpop.f32.mrf.mxu0
      %v699 = vadd.f32 %v450, %v698
      %v700 = vpop.f32.mrf.mxu0
      %v701 = vadd.f32 %v450, %v700
      %702 = vdwg.mxu0
      %v703 = vmax.f32 %v544, 0.0
      %v704 = vmax.f32 %v546, 0.0
      %v705 = vmax.f32 %v657, 0.0
      %v706 = vmax.f32 %v659, 0.0
      %v707 = vmax.f32 %v550, 0.0
      %v708 = vmax.f32 %v552, 0.0
      %v709 = vmax.f32 %v663, 0.0
      %v710 = vmax.f32 %v665, 0.0
      %v711 = vmax.f32 %v556, 0.0
      %v712 = vmax.f32 %v558, 0.0
      %v713 = vmax.f32 %v669, 0.0
      %v714 = vmax.f32 %v671, 0.0
      %v715 = vmax.f32 %v562, 0.0
      %v716 = vmax.f32 %v564, 0.0
      %v717 = vmax.f32 %v675, 0.0
      %v718 = vmax.f32 %v677, 0.0
      %v719 = vmax.f32 %v568, 0.0
      %v720 = vmax.f32 %v570, 0.0
      %v721 = vmax.f32 %v681, 0.0
      %v722 = vmax.f32 %v683, 0.0
      %v723 = vmax.f32 %v574, 0.0
      %v724 = vmax.f32 %v576, 0.0
      %v725 = vmax.f32 %v687, 0.0
      %v726 = vmax.f32 %v689, 0.0
      %v727 = vmax.f32 %v580, 0.0
      %v728 = vmax.f32 %v582, 0.0
      %v729 = vmax.f32 %v693, 0.0
      %v730 = vmax.f32 %v695, 0.0
      %v731 = vmax.f32 %v586, 0.0
      %v732 = vmax.f32 %v588, 0.0
      %v733 = vmax.f32 %v699, 0.0
      %v734 = vmax.f32 %v701, 0.0
      %v735 = vld [vmem:[%s5] sm:$0xff]
      %v736 = vld [vmem:[%s5 + $0x8] sm:$0xff]
      %v737 = vld [vmem:[%s5 + $0x10] sm:$0xff]
      %v738 = vld [vmem:[%s5 + $0x18] sm:$0xff]
      %v739 = vld [vmem:[%s5 + $0x20] sm:$0xff]
      %v740 = vld [vmem:[%s5 + $0x28] sm:$0xff]
      %v741 = vld [vmem:[%s5 + $0x30] sm:$0xff]
      %v742 = vld [vmem:[%s5 + $0x38] sm:$0xff]
      %744 = vset.pattern.permute.xlu0 0
      %745 = vperm.xlu0 %744, %v735
      %v746 = vpop.permute.xlu0 %745
      %749 = vset.pattern.permute.xlu0 0
      %750 = vperm.xlu0 %749, %v736
      %v751 = vpop.permute.xlu0 %750
      %754 = vset.pattern.permute.xlu0 0
      %755 = vperm.xlu0 %754, %v737
      %v756 = vpop.permute.xlu0 %755
      %759 = vset.pattern.permute.xlu0 0
      %760 = vperm.xlu0 %759, %v738
      %v761 = vpop.permute.xlu0 %760
      %764 = vset.pattern.permute.xlu0 0
      %765 = vperm.xlu0 %764, %v739
      %v766 = vpop.permute.xlu0 %765
      %769 = vset.pattern.permute.xlu0 0
      %770 = vperm.xlu0 %769, %v740
      %v771 = vpop.permute.xlu0 %770
      %774 = vset.pattern.permute.xlu0 0
      %775 = vperm.xlu0 %774, %v741
      %v776 = vpop.permute.xlu0 %775
      %779 = vset.pattern.permute.xlu0 0
      %780 = vperm.xlu0 %779, %v742
      %v781 = vpop.permute.xlu0 %780
      %v783 = vmul.f32 %v746, %v703
      %v784 = vmul.f32 %v746, %v704
      %v785 = vmul.f32 %v746, %v705
      %v786 = vmul.f32 %v746, %v706
      %v787 = vmul.f32 %v751, %v707
      %v788 = vmul.f32 %v751, %v708
      %v789 = vmul.f32 %v751, %v709
      %v790 = vmul.f32 %v751, %v710
      %v791 = vmul.f32 %v756, %v711
      %v792 = vmul.f32 %v756, %v712
      %v793 = vmul.f32 %v756, %v713
      %v794 = vmul.f32 %v756, %v714
      %v795 = vmul.f32 %v761, %v715
      %v796 = vmul.f32 %v761, %v716
      %v797 = vmul.f32 %v761, %v717
      %v798 = vmul.f32 %v761, %v718
      %v799 = vmul.f32 %v766, %v719
      %v800 = vmul.f32 %v766, %v720
      %v801 = vmul.f32 %v766, %v721
      %v802 = vmul.f32 %v766, %v722
      %v803 = vmul.f32 %v771, %v723
      %v804 = vmul.f32 %v771, %v724
      %v805 = vmul.f32 %v771, %v725
      %v806 = vmul.f32 %v771, %v726
      %v807 = vmul.f32 %v776, %v727
      %v808 = vmul.f32 %v776, %v728
      %v809 = vmul.f32 %v776, %v729
      %v810 = vmul.f32 %v776, %v730
      %v811 = vmul.f32 %v781, %v731
      %v812 = vmul.f32 %v781, %v732
      %v813 = vmul.f32 %v781, %v733
      %v814 = vmul.f32 %v781, %v734
      %v815 = vadd.f32 %v783, %v787
      %v816 = vadd.f32 %v815, %v791
      %v817 = vadd.f32 %v816, %v795
      %v818 = vadd.f32 %v817, %v799
      %v819 = vadd.f32 %v818, %v803
      %v820 = vadd.f32 %v819, %v807
      %v821 = vadd.f32 %v820, %v811
      %v822 = vrot.slane %v821, 4
      %v823 = vadd.f32 %v821, %v822
      %v824 = vrot.slane %v823, 2
      %v825 = vadd.f32 %v823, %v824
      %v826 = vrot.slane %v825, 1
      %v827 = vadd.f32 %v825, %v826
      %v828 = vadd.f32 %v784, %v788
      %v829 = vadd.f32 %v828, %v792
      %v830 = vadd.f32 %v829, %v796
      %v831 = vadd.f32 %v830, %v800
      %v832 = vadd.f32 %v831, %v804
      %v833 = vadd.f32 %v832, %v808
      %v834 = vadd.f32 %v833, %v812
      %v835 = vrot.slane %v834, 4
      %v836 = vadd.f32 %v834, %v835
      %v837 = vrot.slane %v836, 2
      %v838 = vadd.f32 %v836, %v837
      %v839 = vrot.slane %v838, 1
      %v840 = vadd.f32 %v838, %v839
      %v841 = vadd.f32 %v785, %v789
      %v842 = vadd.f32 %v841, %v793
      %v843 = vadd.f32 %v842, %v797
      %v844 = vadd.f32 %v843, %v801
      %v845 = vadd.f32 %v844, %v805
      %v846 = vadd.f32 %v845, %v809
      %v847 = vadd.f32 %v846, %v813
      %v848 = vrot.slane %v847, 4
      %v849 = vadd.f32 %v847, %v848
      %v850 = vrot.slane %v849, 2
      %v851 = vadd.f32 %v849, %v850
      %v852 = vrot.slane %v851, 1
      %v853 = vadd.f32 %v851, %v852
      %v854 = vadd.f32 %v786, %v790
      %v855 = vadd.f32 %v854, %v794
      %v856 = vadd.f32 %v855, %v798
      %v857 = vadd.f32 %v856, %v802
      %v858 = vadd.f32 %v857, %v806
      %v859 = vadd.f32 %v858, %v810
      %v860 = vadd.f32 %v859, %v814
      %v861 = vrot.slane %v860, 4
      %v862 = vadd.f32 %v860, %v861
      %v863 = vrot.slane %v862, 2
      %v864 = vadd.f32 %v862, %v863
      %v865 = vrot.slane %v864, 1
      %v866 = vadd.f32 %v864, %v865
      %s867 = sld [smem:[#allocation2]]
      %v868 = vstv %s867
      %v869 = vadd.f32 %v827, %v868
      %v870 = vadd.f32 %v840, %v868
      %v871 = vadd.f32 %v853, %v868
      %v872 = vadd.f32 %v866, %v868
      %v877 = vcombine.low %v869, %v870
      %v878 = vcombine.low %v871, %v872
      %v880 = vunpack.c.l.s4 1966171168
      %v881 = vunpack.c.0.s8 %v880
      %v882 = vlaneseq
      %v883 = vshrl.u32 %v882, 7
      %v884 = vsub.s32 %v881, %v883
      %v885 = vrot.slane %v877, %v884
      %v887 = vunpack.c.l.s4 1966171168
      %v888 = vunpack.c.0.s8 %v887
      %v889 = vlaneseq
      %v890 = vshrl.u32 %v889, 7
      %v891 = vsub.s32 %v888, %v890
      %v892 = vrot.slane %v878, %v891
      %v893 = vcombine.low %v885, %v892
      %v895 = vunpack.c.l.s4 1966171168
      %v896 = vunpack.c.0.s8 %v895
      %v897 = vlaneseq
      %v898 = vshrl.u32 %v897, 7
      %v899 = vsub.s32 %v896, %v898
      %v900 = vrot.slane %v893, %v899
      %v902 = vlaneseq
      %vm903 = vcmp.ge.s32.totalorder %v902, 0
      %vm904 = vcmp.lt.s32.totalorder %v902, 512
      %vm905 = vmand %vm903, %vm904
      %906 = vst.msk [vmem:[%s276] sm:$0xf] %vm905, %v900
      %s907 = smul.u32 4, %s19
      %p908 = scmp.lt.s32.totalorder %s907, 7
      %s909 = scalar_select %p908, %s907, 7
      %s910 = scalar_lea.vmem %s7, %s909
      // Predicated region
      $region49: #{model3_forward.1} parent=47 // pred_check
        %p911 = pneg %p189
      $region50: #{model3_forward.1} parent=47 // pred_check_branch
        %913 = sbr.rel (%p911) target = $region52
      $region51: #{model3_forward.1} parent=47 // pred_region
        %s914 = smul.u32 4, %s19
      $region52: #{model3_forward.1} parent=47 // pred_fallthru
        _
    $region48: #{model3_forward.1} parent=5 // pred_fallthru
      _
    %p915 = scmp.le.s32.totalorder 2, %s14
    // Predicated region
    $region53: #{model3_forward.1} parent=5 // pred_check
      %p916 = pneg %p915
    $region54: #{model3_forward.1} parent=5 // pred_check_branch
      %918 = sbr.rel (%p916) target = $region56
    $region55: #{model3_forward.1} parent=5 // pred_region
      %s919 = ssub.s32 %s14, 2
      // Predicated region
      $region57: #{model3_forward.1} parent=55 // pred_check
        %p920 = pneg %p195
      $region58: #{model3_forward.1} parent=55 // pred_check_branch
        %922 = sbr.rel (%p920) target = $region60
      $region59: #{model3_forward.1} parent=55 // pred_region
        %s923 = smul.u32 4, %s20
        %p924 = scmp.lt.s32.totalorder %s923, 7
        %s925 = scalar_select %p924, %s923, 7
        %s926 = scalar_lea.vmem %s7, %s925
      $region60: #{model3_forward.1} parent=55 // pred_fallthru
        _
    $region56: #{model3_forward.1} parent=5 // pred_fallthru
      _
  $region6: #{model3_forward.1} parent=0 // loop_footer
    %s18 = sadd.s32 1, %s14
  $region7: #{model3_forward.1} parent=0 // loop_footer_branch
    %13 = sbr.rel target = $region3
  $region8: #{model3_forward.1} parent=0 // loop_exit
    _

</llo_original>
